<compile_context>
chip_gen: v6e
topology: v6e:2x2x1
jax: 0.10.0
libtpu: 0.0.40
codegen_flags: <defaults>
</compile_context>

<pallas_src>
import functools

import jax
import jax.numpy as jnp
import numpy as np
from jax import lax
from jax.experimental import pallas as pl
from jax.experimental.pallas import tpu as pltpu


def _round_up(x, m):
    return ((x + m - 1) // m) * m


def _build_constants(split_shape, D, Dp, K, Kp):
    """Constant matrices baked at trace time (passed as kernel inputs).

    E (D, Dp):  lane-widening matrix [I_D | 0] -- logits stream in un-padded
                and are widened on the MXU (padded columns become exact 0).
    G (Dp, Dp): block-diagonal segment-sum matrix (identity on padded columns
                so padded softmax columns never divide by zero); row offs[n]
                is the exact indicator of segment n (used for max broadcast).
    C (N, Dp, Kp): selection matrices s.t. (softvars @ C[n])[b, k] equals
                P(A_n = coord_n(k) | x_b) for the row-major flattened joint
                index k; zero on padded d / k entries.
    """
    N = len(split_shape)
    offs = [0]
    for s in split_shape[:-1]:
        offs.append(offs[-1] + s)

    E = np.zeros((D, Dp), np.float32)
    E[np.arange(D), np.arange(D)] = 1.0

    G = np.zeros((Dp, Dp), np.float32)
    for n, s in enumerate(split_shape):
        G[offs[n]:offs[n] + s, offs[n]:offs[n] + s] = 1.0
    for d in range(D, Dp):
        G[d, d] = 1.0

    strides = [int(np.prod(split_shape[n + 1:], dtype=np.int64)) for n in range(N)]
    C = np.zeros((N, Dp, Kp), np.float32)
    ks = np.arange(K)
    for n, s in enumerate(split_shape):
        coord = (ks // strides[n]) % s
        C[n, offs[n] + coord, ks] = 1.0
    return tuple(offs), E, G, C


def _vmem_limit_bytes(TB, D, Dp, Kp, Yp, N):
    """Derive the scoped-VMEM limit from the real footprint (feedback item),
    floored at the default scoped limit and capped below v7x's 64 MiB."""
    consts = 2 * (D * Dp + Dp * Dp + N * Dp * Kp + Kp * Yp) * 4   # double-buffered
    streams = 2 * (TB * D + TB + TB * Dp + TB * Yp + Kp * Yp + 8 * 128) * 4
    interm = (3 * TB * Dp + 2 * TB * Kp + 2 * TB * Yp + 2 * Kp * Yp) * 4
    est = consts + streams + interm
    return int(min(max(4 * est, 32 * 1024 * 1024), 56 * 1024 * 1024))


# ----------------------------------------------------------------------------
# shared in-kernel pieces
# ----------------------------------------------------------------------------
def _softmax_and_joint(split_shape, offs, e_ref, g_ref, c_ref, logits_narrow):
    """Widen the un-padded logits block to Dp lanes (MXU), do per-segment
    stable softmax (segment sums on the MXU), and build the flattened joint
    sample space with selection matmuls (MXU, no lane concatenates)."""
    f32 = jnp.float32
    # Exact widening: column d < D gets logits[:, d] * 1.0, padded columns 0.
    lg = lax.dot_general(logits_narrow.astype(f32), e_ref[...],
                         (((1,), (0,)), ((), ())),
                         preferred_element_type=f32)              # (TB, Dp)

    n_split = len(split_shape)
    # Per-segment max, broadcast back to full width via the segment indicator
    # rows of G (row offs[n] of G is exactly the indicator of segment n).
    # NOTE: review item #9 (stack maxima + one matmul) was judged negligible
    # for small N and riskier to lower; kept as N cheap VPU multiply-adds.
    m_full = jnp.zeros_like(lg)
    for n in range(n_split):
        o, s = offs[n], split_shape[n]
        m_n = jnp.max(lg[:, o:o + s], axis=-1, keepdims=True)     # (TB, 1)
        m_full = m_full + m_n * g_ref[o:o + 1, :]                 # (1, Dp)
    e = jnp.exp(lg - m_full)                                      # one wide EUP exp
    seg_sum = lax.dot_general(e, g_ref[...], (((1,), (0,)), ((), ())),
                              preferred_element_type=f32)         # MXU segment sums
    softvars = e / seg_sum                                        # (TB, Dp)

    joint = lax.dot_general(softvars, c_ref[0], (((1,), (0,)), ((), ())),
                            preferred_element_type=f32)           # (TB, Kp)
    for n in range(1, n_split):
        joint = joint * lax.dot_general(softvars, c_ref[n],
                                        (((1,), (0,)), ((), ())),
                                        preferred_element_type=f32)
    return softvars, joint


def _y_from_labels(labels_ref, yp, y_col):
    """One-hot, valid-row mask and num_joint-augmented label matrix, built
    in-kernel from int32 labels (padded rows carry label = -1)."""
    f32 = jnp.float32
    lab = labels_ref[...]                                          # (TB, 1) int32
    tb = lab.shape[0]
    iota = lax.broadcasted_iota(jnp.int32, (tb, yp), 1)
    onehot = (iota == lab).astype(f32)                             # (TB, Yp)
    valid = (lab >= 0).astype(f32)                                 # (TB, 1)
    col_nj = (iota == y_col).astype(f32)                           # column Y
    y_aug = onehot + valid * col_nj                                # ones col -> num_joint
    return onehot, valid, y_aug


# ----------------------------------------------------------------------------
# fused single-tile kernel (whole padded batch in one grid step)
# ----------------------------------------------------------------------------
def _fused_kernel(split_shape, offs, y_col, stable_num, inv_batch,
                  e_ref, g_ref, c_ref, logits_ref, labels_ref,
                  vars_ref, probs_ref, loss_ref):
    f32 = jnp.float32
    softvars, joint = _softmax_and_joint(split_shape, offs, e_ref, g_ref, c_ref,
                                         logits_ref[...])
    vars_ref[...] = softvars.astype(vars_ref.dtype)

    yp = probs_ref.shape[-1]
    onehot, valid, y_aug = _y_from_labels(labels_ref, yp, y_col)

    # Observation: acc (Kp, Yp); column y_col accumulates num_joint, padded
    # batch rows contribute nothing (their y_aug row is all zero).
    acc = lax.dot_general(joint, y_aug, (((0,), (0,)), ((), ())),
                          preferred_element_type=f32)              # (Kp, Yp)
    num_joint = jnp.maximum(acc[:, y_col:y_col + 1], stable_num)
    prob_y_joint = jnp.clip(jnp.maximum(acc, stable_num) / num_joint, 0.0, 1.0)

    # Inference: plain (TB,Kp)@(Kp,Yp) contraction.
    probs = lax.dot_general(joint, prob_y_joint, (((1,), (0,)), ((), ())),
                            preferred_element_type=f32)            # (TB, Yp)
    probs_ref[...] = probs.astype(probs_ref.dtype)

    # NLL loss (padded rows masked to -log(1) = 0).
    psum = jnp.sum(probs * onehot, axis=1, keepdims=True)          # (TB, 1)
    psum = jnp.where(valid > 0.0, psum, 1.0)
    loss_ref[...] = jnp.sum(-jnp.log(psum), axis=0, keepdims=True) * inv_batch


# ----------------------------------------------------------------------------
# two-phase multi-tile kernels
# ----------------------------------------------------------------------------
def _obs_kernel(split_shape, offs, y_col,
                e_ref, g_ref, c_ref, logits_ref, labels_ref, acc_ref):
    """Phase 1: accumulate one of two partial (Kp, Yp) count tables over its
    share of batch tiles (leading 'parallel' axis -> v7x megacore)."""
    @pl.when(pl.program_id(1) == 0)
    def _init():
        acc_ref[...] = jnp.zeros_like(acc_ref)

    _, joint = _softmax_and_joint(split_shape, offs, e_ref, g_ref, c_ref,
                                  logits_ref[...])
    yp = acc_ref.shape[-1]
    _, _, y_aug = _y_from_labels(labels_ref, yp, y_col)
    acc_ref[...] += lax.dot_general(joint, y_aug, (((0,), (0,)), ((), ())),
                                    preferred_element_type=jnp.float32)


def _inf_kernel(split_shape, offs, y_col, inv_batch,
                e_ref, g_ref, c_ref, prob_ref, logits_ref, labels_ref,
                vars_ref, probs_ref, loss_ref):
    """Phase 2 (fully parallel): recompute joint per tile, emit softmaxes,
    posterior P(Y|X) and a per-tile loss partial (reduced in the wrapper)."""
    f32 = jnp.float32
    softvars, joint = _softmax_and_joint(split_shape, offs, e_ref, g_ref, c_ref,
                                         logits_ref[...])
    vars_ref[...] = softvars.astype(vars_ref.dtype)

    probs = lax.dot_general(joint, prob_ref[...], (((1,), (0,)), ((), ())),
                            preferred_element_type=f32)            # (TB, Yp)
    probs_ref[...] = probs.astype(probs_ref.dtype)

    yp = probs_ref.shape[-1]
    onehot, valid, _ = _y_from_labels(labels_ref, yp, y_col)
    psum = jnp.sum(probs * onehot, axis=1, keepdims=True)
    psum = jnp.where(valid > 0.0, psum, 1.0)
    partial = jnp.sum(-jnp.log(psum), axis=0, keepdims=True) * inv_batch
    loss_ref[...] = partial.reshape(1, 1, 1)


# ----------------------------------------------------------------------------
# wrapper
# ----------------------------------------------------------------------------
def ipnn_forward(logits, labels, num_classes, split_shape, stable_num=1e-6,
                 tile_b=None, single_tile_max=1024):
    """Pallas-backed IPNN.forward for a fresh module (single y_true head,
    select_variables=None, independence_variables=None).

    Returns lane-dense *padded* outputs (no post-kernel slicing):
      variables_all_padded : (B_pad, Dp); columns [offs[n], offs[n]+split[n])
                             hold softmax(A_n); other columns are padding.
      probs_*_padded       : (B_pad, Yp); columns [0, num_classes) hold P(Y|X).
      losses               : [scalar NLL loss]
    """
    B, D = logits.shape
    Y = int(num_classes)
    split_shape = tuple(int(s) for s in split_shape)
    N = len(split_shape)
    assert D == sum(split_shape)
    K = int(np.prod(split_shape))

    f32 = jnp.float32
    Dp = _round_up(D, 128)            # lane-dense softmax slab
    Kp = _round_up(K, 128)            # lane-dense joint sample space
    Yp = _round_up(Y + 1, 128)        # +1: column Y carries num_joint

    offs, E_np, G_np, C_np = _build_constants(split_shape, D, Dp, K, Kp)
    E = jnp.asarray(E_np)
    G = jnp.asarray(G_np)
    C = jnp.asarray(C_np)

    if tile_b is None:
        tile_b = 1024                 # 512-1024 row tiles keep DMA near roofline
    tile_b = max(8, _round_up(int(tile_b), 8))
    tb_whole = max(8, _round_up(B, 8))
    fused = tb_whole <= min(tile_b, single_tile_max)
    if fused:
        TB, B_pad, nbt = tb_whole, tb_whole, 1
    else:
        TB = tile_b
        B_pad = _round_up(B, 2 * TB)  # even #tiles -> 2 parallel partial tables
        nbt = B_pad // TB

    logits_f = jnp.asarray(logits, f32)
    labels_i = jnp.asarray(labels, jnp.int32).reshape(B, 1)
    if B_pad > B:                     # row padding only; label -1 masks pad rows
        logits_f = jnp.pad(logits_f, ((0, B_pad - B), (0, 0)))
        labels_i = jnp.pad(labels_i, ((0, B_pad - B), (0, 0)), constant_values=-1)

    vlim = _vmem_limit_bytes(TB, D, Dp, Kp, Yp, N)

    if fused:
        kern = functools.partial(_fused_kernel, split_shape, offs, Y,
                                 float(stable_num), float(1.0 / B))
        vars_pad, probs_pad, loss_out = pl.pallas_call(
            kern,
            out_shape=(jax.ShapeDtypeStruct((B_pad, Dp), f32),
                       jax.ShapeDtypeStruct((B_pad, Yp), f32),
                       jax.ShapeDtypeStruct((1, 1), f32)),
            grid=(1,),
            in_specs=[
                pl.BlockSpec((D, Dp), lambda i: (0, 0)),
                pl.BlockSpec((Dp, Dp), lambda i: (0, 0)),
                pl.BlockSpec((N, Dp, Kp), lambda i: (0, 0, 0)),
                pl.BlockSpec((TB, D), lambda i: (i, 0)),
                pl.BlockSpec((TB, 1), lambda i: (i, 0)),
            ],
            out_specs=(pl.BlockSpec((TB, Dp), lambda i: (i, 0)),
                       pl.BlockSpec((TB, Yp), lambda i: (i, 0)),
                       pl.BlockSpec((1, 1), lambda i: (0, 0))),
            compiler_params=pltpu.CompilerParams(
                dimension_semantics=("arbitrary",),
                vmem_limit_bytes=vlim),
        )(E, G, C, logits_f, labels_i)
        loss = loss_out[0, 0]
    else:
        # ---- phase 1: two parallel partial (Kp, Yp) count tables ----------
        P = 2
        nbt_p = nbt // P
        obs = functools.partial(_obs_kernel, split_shape, offs, Y)
        partials = pl.pallas_call(
            obs,
            out_shape=jax.ShapeDtypeStruct((P, Kp, Yp), f32),
            grid=(P, nbt_p),
            in_specs=[
                pl.BlockSpec((D, Dp), lambda p, j: (0, 0)),
                pl.BlockSpec((Dp, Dp), lambda p, j: (0, 0)),
                pl.BlockSpec((N, Dp, Kp), lambda p, j: (0, 0, 0)),
                pl.BlockSpec((TB, D), lambda p, j: (p * nbt_p + j, 0)),
                pl.BlockSpec((TB, 1), lambda p, j: (p * nbt_p + j, 0)),
            ],
            out_specs=pl.BlockSpec((None, Kp, Yp), lambda p, j: (p, 0, 0)),
            compiler_params=pltpu.CompilerParams(
                dimension_semantics=("parallel", "arbitrary"),
                vmem_limit_bytes=vlim),
        )(E, G, C, logits_f, labels_i)

        # tiny (Kp, Yp) finalize in the wrapper: sum partials, clamp, clip.
        acc = jnp.sum(partials, axis=0)
        num_joint = jnp.maximum(acc[:, Y:Y + 1], stable_num)
        prob_y_joint = jnp.clip(jnp.maximum(acc, stable_num) / num_joint, 0.0, 1.0)

        # ---- phase 2: posterior / softmaxes / per-tile loss partials -------
        inf = functools.partial(_inf_kernel, split_shape, offs, Y, float(1.0 / B))
        vars_pad, probs_pad, loss_tiles = pl.pallas_call(
            inf,
            out_shape=(jax.ShapeDtypeStruct((B_pad, Dp), f32),
                       jax.ShapeDtypeStruct((B_pad, Yp), f32),
                       jax.ShapeDtypeStruct((nbt, 1, 1), f32)),
            grid=(nbt,),
            in_specs=[
                pl.BlockSpec((D, Dp), lambda i: (0, 0)),
                pl.BlockSpec((Dp, Dp), lambda i: (0, 0)),
                pl.BlockSpec((N, Dp, Kp), lambda i: (0, 0, 0)),
                pl.BlockSpec((Kp, Yp), lambda i: (0, 0)),
                pl.BlockSpec((TB, D), lambda i: (i, 0)),
                pl.BlockSpec((TB, 1), lambda i: (i, 0)),
            ],
            out_specs=(pl.BlockSpec((TB, Dp), lambda i: (i, 0)),
                       pl.BlockSpec((TB, Yp), lambda i: (i, 0)),
                       pl.BlockSpec((1, 1, 1), lambda i: (i, 0, 0))),
            compiler_params=pltpu.CompilerParams(
                dimension_semantics=("parallel",),
                vmem_limit_bytes=vlim),
        )(E, G, C, prob_y_joint, logits_f, labels_i)
        loss = jnp.sum(loss_tiles[:, 0, 0])

    return dict(
        variables_all_padded=vars_pad,          # (B_pad, Dp), see docstring
        probs_train_padded={0: probs_pad},      # (B_pad, Yp), cols >= Y are padding
        probs_pred_padded={0: probs_pad},       # identical for a fresh recorder
        losses=[loss],
        meta=dict(batch=B, num_classes=Y, split_shape=split_shape,
                  split_offsets=offs, padded_batch=B_pad),
    )


# ----------------------------------------------------------------------------
# pure-JAX reference mirroring the PyTorch module (fresh recorder)
# ----------------------------------------------------------------------------
def ipnn_reference(logits, y_true, split_shape, stable_num=1e-6):
    B = logits.shape[0]
    idx = list(np.cumsum(split_shape)[:-1])
    pieces = jnp.split(logits, idx, axis=-1)
    vs = [jax.nn.softmax(p, axis=-1) for p in pieces]
    joint = vs[0].reshape(B, -1)
    for v in vs[1:]:
        joint = (joint[:, :, None] * v[:, None, :]).reshape(B, -1)  # row-major
    nyj = y_true.T @ joint                       # (Y, K)
    nj = jnp.sum(joint, axis=0)                  # (K,)
    prob = jnp.clip(jnp.maximum(nyj, stable_num)
                    / jnp.maximum(nj, stable_num)[None, :], 0.0, 1.0)
    probs = joint @ prob.T                       # (B, Y)
    psum = jnp.sum(probs * y_true, axis=1)
    loss = jnp.sum(-jnp.log(psum)) / B
    return vs, probs, loss


if __name__ == "__main__":
    key = jax.random.PRNGKey(0)
    k1, k2, k3, k4, k5, k6 = jax.random.split(key, 6)

    split_shape = (4, 8)       # A1 (4 states), A2 (8 states)
    Y = 3                      # number of classes
    D = sum(split_shape)

    def check(out, logits, labels, B, check_vars):
        y_true = jax.nn.one_hot(labels, Y, dtype=jnp.float32)
        vs_r, probs_r, loss_r = ipnn_reference(logits, y_true, split_shape)
        vars_np = np.asarray(out["variables_all_padded"])     # host-side slices
        probs_np = np.asarray(out["probs_train_padded"][0])
        if check_vars:
            off = 0
            for s, v_r in zip(split_shape, vs_r):
                np.testing.assert_allclose(vars_np[:B, off:off + s],
                                           np.asarray(v_r), rtol=1e-5, atol=1e-5)
                off += s
        np.testing.assert_allclose(probs_np[:B, :Y], np.asarray(probs_r),
                                   rtol=1e-5, atol=1e-5)
        np.testing.assert_allclose(np.asarray(out["losses"][0]),
                                   np.asarray(loss_r), rtol=1e-5, atol=1e-5)

    # Case 1: tiny batch -> fused single-tile path, zero padding work.
    B = 8
    logits = jax.random.normal(k1, (B, D), dtype=jnp.float32)
    labels = jax.random.randint(k2, (B,), 0, Y)
    out = ipnn_forward(logits, labels, Y, split_shape)
    jax.block_until_ready(out["losses"][0])
    check(out, logits, labels, B, check_vars=True)

    # Case 2: ragged batch -> still fused (row padding masked via label = -1).
    B2 = 37
    logits2 = jax.random.normal(k3, (B2, D), dtype=jnp.float32)
    labels2 = jax.random.randint(k4, (B2,), 0, Y)
    out2 = ipnn_forward(logits2, labels2, Y, split_shape)
    jax.block_until_ready(out2["losses"][0])
    check(out2, logits2, labels2, B2, check_vars=True)

    # Case 3: forced multi-tile -> two-phase path (parallel partial
    # accumulators + parallel inference with per-tile loss partials).
    B3 = 200
    logits3 = jax.random.normal(k5, (B3, D), dtype=jnp.float32)
    labels3 = jax.random.randint(k6, (B3,), 0, Y)
    out3 = ipnn_forward(logits3, labels3, Y, split_shape, tile_b=64)
    jax.block_until_ready(out3["losses"][0])
    check(out3, logits3, labels3, B3, check_vars=False)

    print("KERNEL_OK")
</pallas_src>

<mosaic_0001>
module attributes {stable_mosaic.version = 11 : i64} {
  func.func @_fused_kernel(%arg0: i32, %arg1: memref<12x128xf32, #tpu.memory_space<vmem>>, %arg2: memref<128x128xf32, #tpu.memory_space<vmem>>, %arg3: memref<2x128x128xf32, #tpu.memory_space<vmem>>, %arg4: memref<8x12xf32, #tpu.memory_space<vmem>>, %arg5: memref<8x1xi32, #tpu.memory_space<vmem>>, %arg6: memref<8x128xf32, #tpu.memory_space<vmem>>, %arg7: memref<8x128xf32, #tpu.memory_space<vmem>>, %arg8: memref<1x1xf32, #tpu.memory_space<vmem>>) attributes {dimension_semantics = [#tpu.dimension_semantics<arbitrary>], iteration_bounds = array<i64: 1>, scalar_prefetch = 0 : i64, scratch_operands = 0 : i64, tpu.core_type = #tpu.core_type<tc>, window_params = [{pipeline_mode = #tpu.pipeline_mode<synchronous>, transform_indices = @transform_0, window_bounds = array<i64: 12, 128>}, {pipeline_mode = #tpu.pipeline_mode<synchronous>, transform_indices = @transform_1, window_bounds = array<i64: 128, 128>}, {pipeline_mode = #tpu.pipeline_mode<synchronous>, transform_indices = @transform_2, window_bounds = array<i64: 2, 128, 128>}, {transform_indices = @transform_3, window_bounds = array<i64: 8, 12>}, {transform_indices = @transform_4, window_bounds = array<i64: 8, 1>}, {transform_indices = @transform_5, window_bounds = array<i64: 8, 128>}, {transform_indices = @transform_6, window_bounds = array<i64: 8, 128>}, {pipeline_mode = #tpu.pipeline_mode<synchronous>, transform_indices = @transform_7, window_bounds = array<i64: 1, 1>}]} {
    %c0 = arith.constant 0 : index
    %c0_0 = arith.constant 0 : index
    %0 = vector.load %arg4[%c0, %c0_0] : memref<8x12xf32, #tpu.memory_space<vmem>>, vector<8x12xf32>
    %c0_1 = arith.constant 0 : index
    %c0_2 = arith.constant 0 : index
    %1 = vector.load %arg1[%c0_1, %c0_2] : memref<12x128xf32, #tpu.memory_space<vmem>>, vector<12x128xf32>
    %cst = arith.constant dense<0.000000e+00> : vector<8x128xf32>
    %2 = tpu.matmul %0, %1, %cst {dimension_numbers = #tpu.dot_dimension_numbers<[1], [0], [0], [1], [0, 0, 1, 1], [], []>} : vector<8x12xf32>, vector<12x128xf32>, vector<8x128xf32> -> vector<8x128xf32>
    %cst_3 = arith.constant 0.000000e+00 : f32
    %3 = vector.broadcast %cst_3 : f32 to vector<8x128xf32>
    %4 = vector.extract_strided_slice %2 {offsets = [0, 0], sizes = [8, 4], strides = [1, 1]} : vector<8x128xf32> to vector<8x4xf32>
    %cst_4 = arith.constant dense<0xFF800000> : vector<8xf32>
    %5 = vector.multi_reduction <maximumf>, %4, %cst_4 [1] : vector<8x4xf32> to vector<8xf32>
    %6 = vector.shape_cast %5 : vector<8xf32> to vector<8x1xf32>
    %c0_5 = arith.constant 0 : index
    %c0_6 = arith.constant 0 : index
    %7 = vector.load %arg2[%c0_5, %c0_6] : memref<128x128xf32, #tpu.memory_space<vmem>>, vector<1x128xf32>
    %8 = vector.broadcast %6 : vector<8x1xf32> to vector<8x128xf32>
    %9 = vector.broadcast %7 : vector<1x128xf32> to vector<8x128xf32>
    %10 = arith.mulf %8, %9 : vector<8x128xf32>
    %11 = arith.addf %3, %10 : vector<8x128xf32>
    %12 = vector.extract_strided_slice %2 {offsets = [0, 4], sizes = [8, 8], strides = [1, 1]} : vector<8x128xf32> to vector<8x8xf32>
    %cst_7 = arith.constant dense<0xFF800000> : vector<8xf32>
    %13 = vector.multi_reduction <maximumf>, %12, %cst_7 [1] : vector<8x8xf32> to vector<8xf32>
    %14 = vector.shape_cast %13 : vector<8xf32> to vector<8x1xf32>
    %c4 = arith.constant 4 : index
    %c0_8 = arith.constant 0 : index
    %15 = vector.load %arg2[%c4, %c0_8] : memref<128x128xf32, #tpu.memory_space<vmem>>, vector<1x128xf32>
    %16 = vector.broadcast %14 : vector<8x1xf32> to vector<8x128xf32>
    %17 = vector.broadcast %15 : vector<1x128xf32> to vector<8x128xf32>
    %18 = arith.mulf %16, %17 : vector<8x128xf32>
    %19 = arith.addf %11, %18 : vector<8x128xf32>
    %20 = arith.subf %2, %19 : vector<8x128xf32>
    %21 = math.exp %20 : vector<8x128xf32>
    %c0_9 = arith.constant 0 : index
    %c0_10 = arith.constant 0 : index
    %22 = vector.load %arg2[%c0_9, %c0_10] : memref<128x128xf32, #tpu.memory_space<vmem>>, vector<128x128xf32>
    %cst_11 = arith.constant dense<0.000000e+00> : vector<8x128xf32>
    %23 = tpu.matmul %21, %22, %cst_11 {dimension_numbers = #tpu.dot_dimension_numbers<[1], [0], [0], [1], [0, 0, 1, 1], [], []>} : vector<8x128xf32>, vector<128x128xf32>, vector<8x128xf32> -> vector<8x128xf32>
    %24 = arith.divf %21, %23 : vector<8x128xf32>
    %c0_12 = arith.constant 0 : index
    %c0_13 = arith.constant 0 : index
    %c0_14 = arith.constant 0 : index
    %25 = vector.load %arg3[%c0_12, %c0_13, %c0_14] : memref<2x128x128xf32, #tpu.memory_space<vmem>>, vector<1x128x128xf32>
    %26 = vector.shape_cast %25 : vector<1x128x128xf32> to vector<128x128xf32>
    %cst_15 = arith.constant dense<0.000000e+00> : vector<8x128xf32>
    %27 = tpu.matmul %24, %26, %cst_15 {dimension_numbers = #tpu.dot_dimension_numbers<[1], [0], [0], [1], [0, 0, 1, 1], [], []>} : vector<8x128xf32>, vector<128x128xf32>, vector<8x128xf32> -> vector<8x128xf32>
    %c1 = arith.constant 1 : index
    %c0_16 = arith.constant 0 : index
    %c0_17 = arith.constant 0 : index
    %28 = vector.load %arg3[%c1, %c0_16, %c0_17] : memref<2x128x128xf32, #tpu.memory_space<vmem>>, vector<1x128x128xf32>
    %29 = vector.shape_cast %28 : vector<1x128x128xf32> to vector<128x128xf32>
    %cst_18 = arith.constant dense<0.000000e+00> : vector<8x128xf32>
    %30 = tpu.matmul %24, %29, %cst_18 {dimension_numbers = #tpu.dot_dimension_numbers<[1], [0], [0], [1], [0, 0, 1, 1], [], []>} : vector<8x128xf32>, vector<128x128xf32>, vector<8x128xf32> -> vector<8x128xf32>
    %31 = arith.mulf %27, %30 : vector<8x128xf32>
    %c0_19 = arith.constant 0 : index
    %c0_20 = arith.constant 0 : index
    %32 = vector.load %arg6[%c0_19, %c0_20] : memref<8x128xf32, #tpu.memory_space<vmem>>, vector<8x128xf32>
    tpu.vector_store %arg6[%c0_19, %c0_20], %24 {strides = array<i32>} : memref<8x128xf32, #tpu.memory_space<vmem>>, vector<8x128xf32>,
    %c0_21 = arith.constant 0 : index
    %c0_22 = arith.constant 0 : index
    %33 = vector.load %arg5[%c0_21, %c0_22] : memref<8x1xi32, #tpu.memory_space<vmem>>, vector<8x1xi32>
    %34 = tpu.iota {dimensions = array<i32: 1>} : vector<8x128xi32>
    %35 = vector.broadcast %33 : vector<8x1xi32> to vector<8x128xi32>
    %36 = arith.cmpi eq, %34, %35 : vector<8x128xi32>
    %37 = arith.extui %36 : vector<8x128xi1> to vector<8x128xi32>
    %38 = arith.sitofp %37 : vector<8x128xi32> to vector<8x128xf32>
    %c0_i32 = arith.constant 0 : i32
    %39 = vector.broadcast %c0_i32 : i32 to vector<8x1xi32>
    %40 = arith.cmpi sge, %33, %39 : vector<8x1xi32>
    %41 = arith.extui %40 : vector<8x1xi1> to vector<8x1xi32>
    %42 = arith.sitofp %41 : vector<8x1xi32> to vector<8x1xf32>
    %c3_i32 = arith.constant 3 : i32
    %43 = vector.broadcast %c3_i32 : i32 to vector<8x128xi32>
    %44 = arith.cmpi eq, %34, %43 : vector<8x128xi32>
    %45 = arith.extui %44 : vector<8x128xi1> to vector<8x128xi32>
    %46 = arith.sitofp %45 : vector<8x128xi32> to vector<8x128xf32>
    %47 = vector.broadcast %42 : vector<8x1xf32> to vector<8x128xf32>
    %48 = arith.mulf %47, %46 : vector<8x128xf32>
    %49 = arith.addf %38, %48 : vector<8x128xf32>
    %cst_23 = arith.constant dense<0.000000e+00> : vector<128x128xf32>
    %50 = tpu.matmul %31, %49, %cst_23 {dimension_numbers = #tpu.dot_dimension_numbers<[0], [0], [1], [1], [0, 1, 1, 1], [], []>} : vector<8x128xf32>, vector<8x128xf32>, vector<128x128xf32> -> vector<128x128xf32>
    %51 = vector.extract_strided_slice %50 {offsets = [0, 3], sizes = [128, 1], strides = [1, 1]} : vector<128x128xf32> to vector<128x1xf32>
    %cst_24 = arith.constant 9.99999997E-7 : f32
    %52 = vector.broadcast %cst_24 : f32 to vector<128x1xf32>
    %53 = arith.maximumf %51, %52 : vector<128x1xf32>
    %cst_25 = arith.constant 9.99999997E-7 : f32
    %54 = vector.broadcast %cst_25 : f32 to vector<128x128xf32>
    %55 = arith.maximumf %50, %54 : vector<128x128xf32>
    %56 = vector.broadcast %53 : vector<128x1xf32> to vector<128x128xf32>
    %57 = arith.divf %55, %56 : vector<128x128xf32>
    %cst_26 = arith.constant 0.000000e+00 : f32
    %cst_27 = arith.constant 1.000000e+00 : f32
    %58 = vector.broadcast %cst_26 : f32 to vector<128x128xf32>
    %59 = arith.maximumf %58, %57 : vector<128x128xf32>
    %60 = vector.broadcast %cst_27 : f32 to vector<128x128xf32>
    %61 = arith.minimumf %60, %59 : vector<128x128xf32>
    %cst_28 = arith.constant dense<0.000000e+00> : vector<8x128xf32>
    %62 = tpu.matmul %31, %61, %cst_28 {dimension_numbers = #tpu.dot_dimension_numbers<[1], [0], [0], [1], [0, 0, 1, 1], [], []>} : vector<8x128xf32>, vector<128x128xf32>, vector<8x128xf32> -> vector<8x128xf32>
    %c0_29 = arith.constant 0 : index
    %c0_30 = arith.constant 0 : index
    %63 = vector.load %arg7[%c0_29, %c0_30] : memref<8x128xf32, #tpu.memory_space<vmem>>, vector<8x128xf32>
    tpu.vector_store %arg7[%c0_29, %c0_30], %62 {strides = array<i32>} : memref<8x128xf32, #tpu.memory_space<vmem>>, vector<8x128xf32>,
    %64 = arith.mulf %62, %38 : vector<8x128xf32>
    %cst_31 = arith.constant dense<0.000000e+00> : vector<8xf32>
    %65 = vector.multi_reduction <add>, %64, %cst_31 [1] : vector<8x128xf32> to vector<8xf32>
    %66 = vector.shape_cast %65 : vector<8xf32> to vector<8x1xf32>
    %cst_32 = arith.constant 0.000000e+00 : f32
    %67 = vector.broadcast %cst_32 : f32 to vector<8x1xf32>
    %68 = arith.cmpf ogt, %42, %67 : vector<8x1xf32>
    %cst_33 = arith.constant 1.000000e+00 : f32
    %69 = vector.broadcast %cst_33 : f32 to vector<8x1xf32>
    %70 = arith.select %68, %66, %69 : vector<8x1xi1>, vector<8x1xf32>
    %71 = math.log %70 : vector<8x1xf32>
    %cst_34 = arith.constant 0.000000e+00 : f32
    %72 = vector.broadcast %cst_34 : f32 to vector<8x1xf32>
    %73 = arith.subf %72, %71 : vector<8x1xf32>
    %cst_35 = arith.constant dense<0.000000e+00> : vector<1xf32>
    %74 = vector.multi_reduction <add>, %73, %cst_35 [0] : vector<8x1xf32> to vector<1xf32>
    %75 = vector.shape_cast %74 : vector<1xf32> to vector<1x1xf32>
    %cst_36 = arith.constant 1.250000e-01 : f32
    %76 = vector.broadcast %cst_36 : f32 to vector<1x1xf32>
    %77 = arith.mulf %75, %76 : vector<1x1xf32>
    %c0_37 = arith.constant 0 : index
    %c0_38 = arith.constant 0 : index
    %78 = vector.load %arg8[%c0_37, %c0_38] : memref<1x1xf32, #tpu.memory_space<vmem>>, vector<1x1xf32>
    tpu.vector_store %arg8[%c0_37, %c0_38], %77 {strides = array<i32>} : memref<1x1xf32, #tpu.memory_space<vmem>>, vector<1x1xf32>,
    return
  }
  func.func @transform_0(%arg0: i32) -> (i32, i32) {
    %c0_i32 = arith.constant 0 : i32
    %c0_i32_0 = arith.constant 0 : i32
    %c0_i32_1 = arith.constant 0 : i32
    return %c0_i32, %c0_i32_0 : i32, i32
  }
  func.func @transform_1(%arg0: i32) -> (i32, i32) {
    %c0_i32 = arith.constant 0 : i32
    %c0_i32_0 = arith.constant 0 : i32
    %c0_i32_1 = arith.constant 0 : i32
    return %c0_i32, %c0_i32_0 : i32, i32
  }
  func.func @transform_2(%arg0: i32) -> (i32, i32, i32) {
    %c0_i32 = arith.constant 0 : i32
    %c0_i32_0 = arith.constant 0 : i32
    %c0_i32_1 = arith.constant 0 : i32
    %c0_i32_2 = arith.constant 0 : i32
    return %c0_i32, %c0_i32_0, %c0_i32_1 : i32, i32, i32
  }
  func.func @transform_3(%arg0: i32) -> (i32, i32) {
    %c0_i32 = arith.constant 0 : i32
    %c0_i32_0 = arith.constant 0 : i32
    return %arg0, %c0_i32 : i32, i32
  }
  func.func @transform_4(%arg0: i32) -> (i32, i32) {
    %c0_i32 = arith.constant 0 : i32
    %c0_i32_0 = arith.constant 0 : i32
    return %arg0, %c0_i32 : i32, i32
  }
  func.func @transform_5(%arg0: i32) -> (i32, i32) {
    %c0_i32 = arith.constant 0 : i32
    %c0_i32_0 = arith.constant 0 : i32
    return %arg0, %c0_i32 : i32, i32
  }
  func.func @transform_6(%arg0: i32) -> (i32, i32) {
    %c0_i32 = arith.constant 0 : i32
    %c0_i32_0 = arith.constant 0 : i32
    return %arg0, %c0_i32 : i32, i32
  }
  func.func @transform_7(%arg0: i32) -> (i32, i32) {
    %c0_i32 = arith.constant 0 : i32
    %c0_i32_0 = arith.constant 0 : i32
    %c0_i32_1 = arith.constant 0 : i32
    return %c0_i32, %c0_i32_0 : i32, i32
  }
}

</mosaic_0001>

<llo_original>
// kernel: tpu_custom_call.1
$region0: #{tpu_custom_call.1}
  #allocation0 [shape = 'u32[]', space=smem, size = 0x4, offset = 0x4, fixed_abs, tag = 'smem constant byte address 0x4 - core index']
  #allocation1 [shape = 'u32[144,128]{1,0:T(1,128)}', space=vmem, size = 0x12000, scoped, tag = 'internal scratch']
  %s0 = inlined_call_operand.hbm [shape: f32[12,128], index: 0, kind: input, shape index: {}]
  %s1 = inlined_call_operand.hbm [shape: f32[128,128], index: 1, kind: input, shape index: {}]
  %s2 = inlined_call_operand.hbm [shape: f32[2,128,128], index: 2, kind: input, shape index: {}]
  %s3 = inlined_call_operand.vmem [shape: f32[8,12], index: 3, kind: input, shape index: {}]
  %s4 = inlined_call_operand.vmem [shape: s32[8,1], index: 4, kind: input, shape index: {}]
  %s5 = inlined_call_operand.hbm [shape: f32[8,128], index: 5, kind: output, shape index: {0}]
  %s6 = inlined_call_operand.hbm [shape: f32[8,128], index: 6, kind: output, shape index: {1}]
  %s7 = inlined_call_operand.hbm [shape: f32[1,1], index: 7, kind: output, shape index: {2}]
  %8 = xla_tuple %s5, %s6, %s7
  %s9 = sld [smem:[#allocation0]]
  $region58: #{tpu_custom_call.1} parent=0
    _
  %s11 = ssub.s32 1, %s9
  %s12 = scalar_select 0, %s11, %s9
  $region1: #{tpu_custom_call.1} parent=0
    #allocation2 [shape = 'u8[8192]{0}', space=vmem, size = 0x2000, scoped, tag = 'input window, operand 0, single buffered']
    #allocation3 [shape = 's32[1]{0}', space=sflag, size = 0x4, scoped, tag = 'scoped memory for tpu_custom_call.1']
    #allocation4 [shape = 's32[1]{0}', space=sflag, size = 0x4, scoped, tag = 'scoped memory for tpu_custom_call.1']
    #allocation5 [shape = 'u8[65536]{0}', space=vmem, size = 0x10000, scoped, tag = 'input window, operand 1, single buffered']
    #allocation6 [shape = 's32[1]{0}', space=sflag, size = 0x4, scoped, tag = 'scoped memory for tpu_custom_call.1']
    #allocation7 [shape = 'u8[131072]{0}', space=vmem, size = 0x20000, scoped, tag = 'input window, operand 2, single buffered']
    #allocation8 [shape = 'u8[4096]{0}', space=vmem, size = 0x1000, scoped, tag = 'output window, operand 0, single buffered']
    #allocation9 [shape = 'u8[4096]{0}', space=vmem, size = 0x1000, scoped, tag = 'output window, operand 1, single buffered']
    #allocation10 [shape = 's32[1]{0}', space=sflag, size = 0x4, scoped, tag = 'scoped memory for tpu_custom_call.1']
    #allocation11 [shape = 'u8[512]{0}', space=vmem, size = 0x400, scoped, tag = 'output window, operand 2, single buffered']
    %13 = vsyncpa [#allocation3], 0
    %14 = vsyncpa [#allocation6], 0
    %15 = vsyncpa [#allocation4], 0
    %16 = vsyncpa [#allocation10], 0
    // Predicated region
    $region2: #{tpu_custom_call.1} parent=1 // pred_check
      _
    $region3: #{tpu_custom_call.1} parent=1 // pred_check_branch
      %18 = sbr.rel (0) target = $region5
    $region4: #{tpu_custom_call.1} parent=1 // pred_region
      %s20 = ssub.s32 256, 256
      %21 = vsyncadd [#allocation3], %s20
      %s22 = sshll.u32 [#allocation2], 4
      %s23 = int_to_ptr.vmem [resolvable:$true] %s22
      %28 = dma.hbm_to_vmem [thread:$0]  %s0, 256, %s23, [#allocation3], 128, 128, 8
    $region5: #{tpu_custom_call.1} parent=1 // pred_fallthru
      _
    // Predicated region
    $region6: #{tpu_custom_call.1} parent=1 // pred_check
      _
    $region7: #{tpu_custom_call.1} parent=1 // pred_check_branch
      %30 = sbr.rel (0) target = $region9
    $region8: #{tpu_custom_call.1} parent=1 // pred_region
      %s32 = ssub.s32 2048, 2048
      %33 = vsyncadd [#allocation6], %s32
      %s34 = sshll.u32 [#allocation5], 4
      %s35 = int_to_ptr.vmem [resolvable:$true] %s34
      %40 = dma.hbm_to_vmem [thread:$0]  %s1, 2048, %s35, [#allocation6], 128, 128, 8
    $region9: #{tpu_custom_call.1} parent=1 // pred_fallthru
      _
    // Predicated region
    $region10: #{tpu_custom_call.1} parent=1 // pred_check
      _
    $region11: #{tpu_custom_call.1} parent=1 // pred_check_branch
      %42 = sbr.rel (0) target = $region13
    $region12: #{tpu_custom_call.1} parent=1 // pred_region
      %s44 = ssub.s32 4096, 4096
      %45 = vsyncadd [#allocation6], %s44
      %s46 = sshll.u32 [#allocation7], 4
      %s47 = int_to_ptr.vmem [resolvable:$true] %s46
      %52 = dma.hbm_to_vmem [thread:$0]  %s2, 4096, %s47, [#allocation6], 128, 128, 8
    $region13: #{tpu_custom_call.1} parent=1 // pred_fallthru
      _
    // Predicated region
    $region14: #{tpu_custom_call.1} parent=1 // pred_check
      _
    $region15: #{tpu_custom_call.1} parent=1 // pred_check_branch
      %54 = sbr.rel (0) target = $region17
    $region16: #{tpu_custom_call.1} parent=1 // pred_region
      _
    $region17: #{tpu_custom_call.1} parent=1 // pred_fallthru
      _
    // Predicated region
    $region18: #{tpu_custom_call.1} parent=1 // pred_check
      _
    $region19: #{tpu_custom_call.1} parent=1 // pred_check_branch
      %56 = sbr.rel (0) target = $region21
    $region20: #{tpu_custom_call.1} parent=1 // pred_region
      _
    $region21: #{tpu_custom_call.1} parent=1 // pred_fallthru
      _
    // Predicated region
    $region22: #{tpu_custom_call.1} parent=1 // pred_check
      _
    $region23: #{tpu_custom_call.1} parent=1 // pred_check_branch
      %58 = sbr.rel (0) target = $region25
    $region24: #{tpu_custom_call.1} parent=1 // pred_region
      %59 = dma.done [#allocation3], 256
    $region25: #{tpu_custom_call.1} parent=1 // pred_fallthru
      _
    // Predicated region
    $region26: #{tpu_custom_call.1} parent=1 // pred_check
      _
    $region27: #{tpu_custom_call.1} parent=1 // pred_check_branch
      %61 = sbr.rel (0) target = $region29
    $region28: #{tpu_custom_call.1} parent=1 // pred_region
      %62 = dma.done [#allocation6], 2048
    $region29: #{tpu_custom_call.1} parent=1 // pred_fallthru
      _
    // Predicated region
    $region30: #{tpu_custom_call.1} parent=1 // pred_check
      _
    $region31: #{tpu_custom_call.1} parent=1 // pred_check_branch
      %64 = sbr.rel (0) target = $region33
    $region32: #{tpu_custom_call.1} parent=1 // pred_region
      %65 = dma.done [#allocation6], 4096
    $region33: #{tpu_custom_call.1} parent=1 // pred_fallthru
      _
    %v66 = vld [vmem:[%s3] sm:$0xff]
    %v67 = vld [vmem:[#allocation2] sm:$0xff]
    %v68 = vld [vmem:[#allocation2 + $0x8] sm:$0xf]
    %vm69 = vcmask 97280
    %v71 = vsel %vm69, %v66, 0
    %vm73 = vcmask 1043456
    %v75 = vsel %vm73, %v68, 0
    %77 = vmatprep.subr.mxu0 0.0
    %78 = vmatpush1.msra.mxu0 0.0
    %79 = vmatprep.subr.mxu0 0.0
    %80 = vmatpush1.msra.mxu0 0.0
    %81 = vmatprep.subr.mxu0 0.0
    %82 = vmatpush1.msra.mxu0 0.0
    %83 = vmatprep.subr.mxu0 0.0
    %84 = vmatpush1.msra.mxu0 0.0
    %85 = vmatprep.subr.mxu0 0.0
    %86 = vmatpush1.msra.mxu0 0.0
    %87 = vmatprep.subr.mxu0 0.0
    %88 = vmatpush1.msra.mxu0 0.0
    %89 = vmatprep.subr.mxu0 0.0
    %90 = vmatpush1.msra.mxu0 0.0
    %91 = vmatprep.subr.mxu0 0.0
    %92 = vmatpush1.msra.mxu0 0.0
    %93 = vmatprep.subr.mxu0 0.0
    %94 = vmatpush1.msra.mxu0 0.0
    %95 = vmatprep.subr.mxu0 0.0
    %96 = vmatpush1.msra.mxu0 0.0
    %97 = vmatprep.subr.mxu0 0.0
    %98 = vmatpush1.msra.mxu0 0.0
    %99 = vmatprep.subr.mxu0 0.0
    %100 = vmatpush1.msra.mxu0 0.0
    %101 = vmatprep.subr.mxu0 0.0
    %102 = vmatpush1.msra.mxu0 0.0
    %103 = vmatprep.subr.mxu0 0.0
    %104 = vmatpush1.msra.mxu0 0.0
    %105 = vmatprep.subr.mxu0 0.0
    %106 = vmatpush1.msra.mxu0 %v75
    %107 = vmatprep.subr.mxu0 0.0
    %108 = vmatpush1.msra.mxu0 %v67
    %109 = vmatprep.subr.mxu0 0.0
    %110 = vmatpush2.msra.mxu0 0.0
    %111 = vmatprep.subr.mxu0 0.0
    %112 = vmatpush2.msra.mxu0 0.0
    %113 = vmatprep.subr.mxu0 0.0
    %114 = vmatpush2.msra.mxu0 0.0
    %115 = vmatprep.subr.mxu0 0.0
    %116 = vmatpush2.msra.mxu0 0.0
    %117 = vmatprep.subr.mxu0 0.0
    %118 = vmatpush2.msra.mxu0 0.0
    %119 = vmatprep.subr.mxu0 0.0
    %120 = vmatpush2.msra.mxu0 0.0
    %121 = vmatprep.subr.mxu0 0.0
    %122 = vmatpush2.msra.mxu0 0.0
    %123 = vmatprep.subr.mxu0 0.0
    %124 = vmatpush2.msra.mxu0 0.0
    %125 = vmatprep.subr.mxu0 0.0
    %126 = vmatpush2.msra.mxu0 0.0
    %127 = vmatprep.subr.mxu0 0.0
    %128 = vmatpush2.msra.mxu0 0.0
    %129 = vmatprep.subr.mxu0 0.0
    %130 = vmatpush2.msra.mxu0 0.0
    %131 = vmatprep.subr.mxu0 0.0
    %132 = vmatpush2.msra.mxu0 0.0
    %133 = vmatprep.subr.mxu0 0.0
    %134 = vmatpush2.msra.mxu0 0.0
    %135 = vmatprep.subr.mxu0 0.0
    %136 = vmatpush2.msra.mxu0 0.0
    %137 = vmatprep.subr.mxu0 0.0
    %138 = vmatpush2.msra.mxu0 0.0
    %139 = vmatprep.subr.mxu0 0.0
    %140 = vmatpush2.msra.mxu0 0.0
    %141 = vmatprep.mubr.f32.mxu0 0.0
    %142 = vmatmul.mubr.f32.gmra.mxu0 %v71
    %v143 = vpop.f32.mrf.mxu0
    %v144 = vadd.f32 0.0, %v143
    %v145 = vpop.f32.mrf.mxu0
    %146 = vdwg.mxu0
    %vm147 = vcmask 31744
    %v148 = vsel %vm147, %v144, -inf
    %149 = vmax.xlane.f32.xlu0 %v148
    %v150 = vpop.xlane.xlu0 %149
    %v151 = vld [vmem:[#allocation5] sm:$0x1]
    %v152 = vlaneseq
    %v153 = vshrl.u32 %v152, 7
    %v154 = vsub.s32 0, %v153
    %v155 = vrot.slane %v151, %v154
    %v156 = vmul.f32 %v150, %v155
    %v157 = vadd.f32 %v156, 0.0
    %vm158 = vcmask 97312
    %v159 = vsel %vm158, %v144, -inf
    %160 = vmax.xlane.f32.xlu0 %v159
    %v161 = vpop.xlane.xlu0 %160
    %v162 = vld [vmem:[#allocation5 + $0x4] sm:$0x1]
    %v163 = vlaneseq
    %v164 = vshrl.u32 %v163, 7
    %v165 = vsub.s32 0, %v164
    %v166 = vrot.slane %v162, %v165
    %v167 = vmul.f32 %v161, %v166
    %v168 = vadd.f32 %v157, %v167
    %v169 = vsub.f32 %v144, %v168
    %v170 = vmul.f32 %v169, 1.442695
    %v171 = vpow.pop %v170
    %v172 = vld [vmem:[#allocation5] sm:$0xff]
    %v173 = vld [vmem:[#allocation5 + $0x8] sm:$0xff]
    %v174 = vld [vmem:[#allocation5 + $0x10] sm:$0xff]
    %v175 = vld [vmem:[#allocation5 + $0x18] sm:$0xff]
    %v176 = vld [vmem:[#allocation5 + $0x20] sm:$0xff]
    %v177 = vld [vmem:[#allocation5 + $0x28] sm:$0xff]
    %v178 = vld [vmem:[#allocation5 + $0x30] sm:$0xff]
    %v179 = vld [vmem:[#allocation5 + $0x38] sm:$0xff]
    %v180 = vld [vmem:[#allocation5 + $0x40] sm:$0xff]
    %v181 = vld [vmem:[#allocation5 + $0x48] sm:$0xff]
    %v182 = vld [vmem:[#allocation5 + $0x50] sm:$0xff]
    %v183 = vld [vmem:[#allocation5 + $0x58] sm:$0xff]
    %v184 = vld [vmem:[#allocation5 + $0x60] sm:$0xff]
    %v185 = vld [vmem:[#allocation5 + $0x68] sm:$0xff]
    %v186 = vld [vmem:[#allocation5 + $0x70] sm:$0xff]
    %v187 = vld [vmem:[#allocation5 + $0x78] sm:$0xff]
    %188 = vmatprep.subr.mxu0 0.0
    %189 = vmatpush1.msra.mxu0 %v187
    %190 = vmatprep.subr.mxu0 0.0
    %191 = vmatpush1.msra.mxu0 %v186
    %192 = vmatprep.subr.mxu0 0.0
    %193 = vmatpush1.msra.mxu0 %v185
    %194 = vmatprep.subr.mxu0 0.0
    %195 = vmatpush1.msra.mxu0 %v184
    %196 = vmatprep.subr.mxu0 0.0
    %197 = vmatpush1.msra.mxu0 %v183
    %198 = vmatprep.subr.mxu0 0.0
    %199 = vmatpush1.msra.mxu0 %v182
    %200 = vmatprep.subr.mxu0 0.0
    %201 = vmatpush1.msra.mxu0 %v181
    %202 = vmatprep.subr.mxu0 0.0
    %203 = vmatpush1.msra.mxu0 %v180
    %204 = vmatprep.subr.mxu0 0.0
    %205 = vmatpush1.msra.mxu0 %v179
    %206 = vmatprep.subr.mxu0 0.0
    %207 = vmatpush1.msra.mxu0 %v178
    %208 = vmatprep.subr.mxu0 0.0
    %209 = vmatpush1.msra.mxu0 %v177
    %210 = vmatprep.subr.mxu0 0.0
    %211 = vmatpush1.msra.mxu0 %v176
    %212 = vmatprep.subr.mxu0 0.0
    %213 = vmatpush1.msra.mxu0 %v175
    %214 = vmatprep.subr.mxu0 0.0
    %215 = vmatpush1.msra.mxu0 %v174
    %216 = vmatprep.subr.mxu0 0.0
    %217 = vmatpush1.msra.mxu0 %v173
    %218 = vmatprep.subr.mxu0 0.0
    %219 = vmatpush1.msra.mxu0 %v172
    %220 = vmatprep.subr.mxu0 0.0
    %221 = vmatpush2.msra.mxu0 0.0
    %222 = vmatprep.subr.mxu0 0.0
    %223 = vmatpush2.msra.mxu0 0.0
    %224 = vmatprep.subr.mxu0 0.0
    %225 = vmatpush2.msra.mxu0 0.0
    %226 = vmatprep.subr.mxu0 0.0
    %227 = vmatpush2.msra.mxu0 0.0
    %228 = vmatprep.subr.mxu0 0.0
    %229 = vmatpush2.msra.mxu0 0.0
    %230 = vmatprep.subr.mxu0 0.0
    %231 = vmatpush2.msra.mxu0 0.0
    %232 = vmatprep.subr.mxu0 0.0
    %233 = vmatpush2.msra.mxu0 0.0
    %234 = vmatprep.subr.mxu0 0.0
    %235 = vmatpush2.msra.mxu0 0.0
    %236 = vmatprep.subr.mxu0 0.0
    %237 = vmatpush2.msra.mxu0 0.0
    %238 = vmatprep.subr.mxu0 0.0
    %239 = vmatpush2.msra.mxu0 0.0
    %240 = vmatprep.subr.mxu0 0.0
    %241 = vmatpush2.msra.mxu0 0.0
    %242 = vmatprep.subr.mxu0 0.0
    %243 = vmatpush2.msra.mxu0 0.0
    %244 = vmatprep.subr.mxu0 0.0
    %245 = vmatpush2.msra.mxu0 0.0
    %246 = vmatprep.subr.mxu0 0.0
    %247 = vmatpush2.msra.mxu0 0.0
    %248 = vmatprep.subr.mxu0 0.0
    %249 = vmatpush2.msra.mxu0 0.0
    %250 = vmatprep.subr.mxu0 0.0
    %251 = vmatpush2.msra.mxu0 0.0
    %252 = vmatprep.mubr.f32.mxu0 0.0
    %253 = vmatmul.mubr.f32.gmra.mxu0 %v171
    %v254 = vpop.f32.mrf.mxu0
    %v255 = vadd.f32 0.0, %v254
    %v256 = vpop.f32.mrf.mxu0
    %257 = vdwg.mxu0
    %v258 = vrcp.pop %v255
    %v259 = vmul.f32 %v171, %v258
    %v260 = vld [vmem:[#allocation7] sm:$0xff]
    %v261 = vld [vmem:[#allocation7 + $0x8] sm:$0xff]
    %v262 = vld [vmem:[#allocation7 + $0x10] sm:$0xff]
    %v263 = vld [vmem:[#allocation7 + $0x18] sm:$0xff]
    %v264 = vld [vmem:[#allocation7 + $0x20] sm:$0xff]
    %v265 = vld [vmem:[#allocation7 + $0x28] sm:$0xff]
    %v266 = vld [vmem:[#allocation7 + $0x30] sm:$0xff]
    %v267 = vld [vmem:[#allocation7 + $0x38] sm:$0xff]
    %v268 = vld [vmem:[#allocation7 + $0x40] sm:$0xff]
    %v269 = vld [vmem:[#allocation7 + $0x48] sm:$0xff]
    %v270 = vld [vmem:[#allocation7 + $0x50] sm:$0xff]
    %v271 = vld [vmem:[#allocation7 + $0x58] sm:$0xff]
    %v272 = vld [vmem:[#allocation7 + $0x60] sm:$0xff]
    %v273 = vld [vmem:[#allocation7 + $0x68] sm:$0xff]
    %v274 = vld [vmem:[#allocation7 + $0x70] sm:$0xff]
    %v275 = vld [vmem:[#allocation7 + $0x78] sm:$0xff]
    %276 = vmatprep.subr.mxu0 0.0
    %277 = vmatpush1.msra.mxu0 %v275
    %278 = vmatprep.subr.mxu0 0.0
    %279 = vmatpush1.msra.mxu0 %v274
    %280 = vmatprep.subr.mxu0 0.0
    %281 = vmatpush1.msra.mxu0 %v273
    %282 = vmatprep.subr.mxu0 0.0
    %283 = vmatpush1.msra.mxu0 %v272
    %284 = vmatprep.subr.mxu0 0.0
    %285 = vmatpush1.msra.mxu0 %v271
    %286 = vmatprep.subr.mxu0 0.0
    %287 = vmatpush1.msra.mxu0 %v270
    %288 = vmatprep.subr.mxu0 0.0
    %289 = vmatpush1.msra.mxu0 %v269
    %290 = vmatprep.subr.mxu0 0.0
    %291 = vmatpush1.msra.mxu0 %v268
    %292 = vmatprep.subr.mxu0 0.0
    %293 = vmatpush1.msra.mxu0 %v267
    %294 = vmatprep.subr.mxu0 0.0
    %295 = vmatpush1.msra.mxu0 %v266
    %296 = vmatprep.subr.mxu0 0.0
    %297 = vmatpush1.msra.mxu0 %v265
    %298 = vmatprep.subr.mxu0 0.0
    %299 = vmatpush1.msra.mxu0 %v264
    %300 = vmatprep.subr.mxu0 0.0
    %301 = vmatpush1.msra.mxu0 %v263
    %302 = vmatprep.subr.mxu0 0.0
    %303 = vmatpush1.msra.mxu0 %v262
    %304 = vmatprep.subr.mxu0 0.0
    %305 = vmatpush1.msra.mxu0 %v261
    %306 = vmatprep.subr.mxu0 0.0
    %307 = vmatpush1.msra.mxu0 %v260
    %308 = vmatprep.subr.mxu0 0.0
    %309 = vmatpush2.msra.mxu0 0.0
    %310 = vmatprep.subr.mxu0 0.0
    %311 = vmatpush2.msra.mxu0 0.0
    %312 = vmatprep.subr.mxu0 0.0
    %313 = vmatpush2.msra.mxu0 0.0
    %314 = vmatprep.subr.mxu0 0.0
    %315 = vmatpush2.msra.mxu0 0.0
    %316 = vmatprep.subr.mxu0 0.0
    %317 = vmatpush2.msra.mxu0 0.0
    %318 = vmatprep.subr.mxu0 0.0
    %319 = vmatpush2.msra.mxu0 0.0
    %320 = vmatprep.subr.mxu0 0.0
    %321 = vmatpush2.msra.mxu0 0.0
    %322 = vmatprep.subr.mxu0 0.0
    %323 = vmatpush2.msra.mxu0 0.0
    %324 = vmatprep.subr.mxu0 0.0
    %325 = vmatpush2.msra.mxu0 0.0
    %326 = vmatprep.subr.mxu0 0.0
    %327 = vmatpush2.msra.mxu0 0.0
    %328 = vmatprep.subr.mxu0 0.0
    %329 = vmatpush2.msra.mxu0 0.0
    %330 = vmatprep.subr.mxu0 0.0
    %331 = vmatpush2.msra.mxu0 0.0
    %332 = vmatprep.subr.mxu0 0.0
    %333 = vmatpush2.msra.mxu0 0.0
    %334 = vmatprep.subr.mxu0 0.0
    %335 = vmatpush2.msra.mxu0 0.0
    %336 = vmatprep.subr.mxu0 0.0
    %337 = vmatpush2.msra.mxu0 0.0
    %338 = vmatprep.subr.mxu0 0.0
    %339 = vmatpush2.msra.mxu0 0.0
    %340 = vmatprep.mubr.f32.mxu0 0.0
    %341 = vmatmul.mubr.f32.gmra.mxu0 %v259
    %v342 = vpop.f32.mrf.mxu0
    %v343 = vadd.f32 0.0, %v342
    %v344 = vpop.f32.mrf.mxu0
    %345 = vdwg.mxu0
    %s346 = scalar_lea.vmem [#allocation7], 128
    %v347 = vld [vmem:[%s346] sm:$0xff]
    %v348 = vld [vmem:[%s346 + $0x8] sm:$0xff]
    %v349 = vld [vmem:[%s346 + $0x10] sm:$0xff]
    %v350 = vld [vmem:[%s346 + $0x18] sm:$0xff]
    %v351 = vld [vmem:[%s346 + $0x20] sm:$0xff]
    %v352 = vld [vmem:[%s346 + $0x28] sm:$0xff]
    %v353 = vld [vmem:[%s346 + $0x30] sm:$0xff]
    %v354 = vld [vmem:[%s346 + $0x38] sm:$0xff]
    %v355 = vld [vmem:[%s346 + $0x40] sm:$0xff]
    %v356 = vld [vmem:[%s346 + $0x48] sm:$0xff]
    %v357 = vld [vmem:[%s346 + $0x50] sm:$0xff]
    %v358 = vld [vmem:[%s346 + $0x58] sm:$0xff]
    %v359 = vld [vmem:[%s346 + $0x60] sm:$0xff]
    %v360 = vld [vmem:[%s346 + $0x68] sm:$0xff]
    %v361 = vld [vmem:[%s346 + $0x70] sm:$0xff]
    %v362 = vld [vmem:[%s346 + $0x78] sm:$0xff]
    %363 = vmatprep.subr.mxu0 0.0
    %364 = vmatpush1.msra.mxu0 %v362
    %365 = vmatprep.subr.mxu0 0.0
    %366 = vmatpush1.msra.mxu0 %v361
    %367 = vmatprep.subr.mxu0 0.0
    %368 = vmatpush1.msra.mxu0 %v360
    %369 = vmatprep.subr.mxu0 0.0
    %370 = vmatpush1.msra.mxu0 %v359
    %371 = vmatprep.subr.mxu0 0.0
    %372 = vmatpush1.msra.mxu0 %v358
    %373 = vmatprep.subr.mxu0 0.0
    %374 = vmatpush1.msra.mxu0 %v357
    %375 = vmatprep.subr.mxu0 0.0
    %376 = vmatpush1.msra.mxu0 %v356
    %377 = vmatprep.subr.mxu0 0.0
    %378 = vmatpush1.msra.mxu0 %v355
    %379 = vmatprep.subr.mxu0 0.0
    %380 = vmatpush1.msra.mxu0 %v354
    %381 = vmatprep.subr.mxu0 0.0
    %382 = vmatpush1.msra.mxu0 %v353
    %383 = vmatprep.subr.mxu0 0.0
    %384 = vmatpush1.msra.mxu0 %v352
    %385 = vmatprep.subr.mxu0 0.0
    %386 = vmatpush1.msra.mxu0 %v351
    %387 = vmatprep.subr.mxu0 0.0
    %388 = vmatpush1.msra.mxu0 %v350
    %389 = vmatprep.subr.mxu0 0.0
    %390 = vmatpush1.msra.mxu0 %v349
    %391 = vmatprep.subr.mxu0 0.0
    %392 = vmatpush1.msra.mxu0 %v348
    %393 = vmatprep.subr.mxu0 0.0
    %394 = vmatpush1.msra.mxu0 %v347
    %395 = vmatprep.subr.mxu0 0.0
    %396 = vmatpush2.msra.mxu0 0.0
    %397 = vmatprep.subr.mxu0 0.0
    %398 = vmatpush2.msra.mxu0 0.0
    %399 = vmatprep.subr.mxu0 0.0
    %400 = vmatpush2.msra.mxu0 0.0
    %401 = vmatprep.subr.mxu0 0.0
    %402 = vmatpush2.msra.mxu0 0.0
    %403 = vmatprep.subr.mxu0 0.0
    %404 = vmatpush2.msra.mxu0 0.0
    %405 = vmatprep.subr.mxu0 0.0
    %406 = vmatpush2.msra.mxu0 0.0
    %407 = vmatprep.subr.mxu0 0.0
    %408 = vmatpush2.msra.mxu0 0.0
    %409 = vmatprep.subr.mxu0 0.0
    %410 = vmatpush2.msra.mxu0 0.0
    %411 = vmatprep.subr.mxu0 0.0
    %412 = vmatpush2.msra.mxu0 0.0
    %413 = vmatprep.subr.mxu0 0.0
    %414 = vmatpush2.msra.mxu0 0.0
    %415 = vmatprep.subr.mxu0 0.0
    %416 = vmatpush2.msra.mxu0 0.0
    %417 = vmatprep.subr.mxu0 0.0
    %418 = vmatpush2.msra.mxu0 0.0
    %419 = vmatprep.subr.mxu0 0.0
    %420 = vmatpush2.msra.mxu0 0.0
    %421 = vmatprep.subr.mxu0 0.0
    %422 = vmatpush2.msra.mxu0 0.0
    %423 = vmatprep.subr.mxu0 0.0
    %424 = vmatpush2.msra.mxu0 0.0
    %425 = vmatprep.subr.mxu0 0.0
    %426 = vmatpush2.msra.mxu0 0.0
    %427 = vmatprep.mubr.f32.mxu0 0.0
    %428 = vmatmul.mubr.f32.gmra.mxu0 %v259
    %v429 = vpop.f32.mrf.mxu0
    %v430 = vadd.f32 0.0, %v429
    %v431 = vpop.f32.mrf.mxu0
    %432 = vdwg.mxu0
    %v433 = vmul.f32 %v343, %v430
    %434 = vst [vmem:[#allocation8] sm:$0xff] %v259
    %v435 = vld [vmem:[%s4] sm:$0xff]
    %v436 = vlaneseq
    %v437 = vand.u32 %v436, 127
    %438 = vset.pattern.permute.xlu0 0
    %439 = vperm.xlu0 %438, %v435
    %v440 = vpop.permute.xlu0 %439
    %vm441 = vcmp.eq.s32.totalorder %v437, %v440
    %v442 = vsel %vm441, 1, 0
    %v443 = vcvt.s32.f32 %v442
    %vm444 = vcmp.ge.s32.totalorder %v435, 0
    %v445 = vsel %vm444, 1, 0
    %v446 = vcvt.s32.f32 %v445
    %vm447 = vcmp.eq.s32.totalorder %v437, 3
    %v448 = vsel %vm447, 1, 0
    %v449 = vcvt.s32.f32 %v448
    %451 = vset.pattern.permute.xlu0 0
    %452 = vperm.xlu0 %451, %v446
    %v453 = vpop.permute.xlu0 %452
    %v455 = vmul.f32 %v453, %v449
    %v456 = vadd.f32 %v443, %v455
    %457 = vxpose.xlu0.b32.start [1/16] %v433, 128
    %458 = vxpose.xlu0.b32.cont [2/16] 0.0, 128
    %459 = vxpose.xlu0.b32.cont [3/16] 0.0, 128
    %460 = vxpose.xlu0.b32.cont [4/16] 0.0, 128
    %461 = vxpose.xlu0.b32.cont [5/16] 0.0, 128
    %462 = vxpose.xlu0.b32.cont [6/16] 0.0, 128
    %463 = vxpose.xlu0.b32.cont [7/16] 0.0, 128
    %464 = vxpose.xlu0.b32.cont [8/16] 0.0, 128
    %465 = vxpose.xlu0.b32.cont [9/16] 0.0, 128
    %466 = vxpose.xlu0.b32.cont [10/16] 0.0, 128
    %467 = vxpose.xlu0.b32.cont [11/16] 0.0, 128
    %468 = vxpose.xlu0.b32.cont [12/16] 0.0, 128
    %469 = vxpose.xlu0.b32.cont [13/16] 0.0, 128
    %470 = vxpose.xlu0.b32.cont [14/16] 0.0, 128
    %471 = vxpose.xlu0.b32.cont [15/16] 0.0, 128
    %472 = vxpose.xlu0.b32.end [16/16] 0.0, 128
    %v473 = vpop.trf.xlu0
    %v474 = vpop.trf.xlu0
    %v475 = vpop.trf.xlu0
    %v476 = vpop.trf.xlu0
    %v477 = vpop.trf.xlu0
    %v478 = vpop.trf.xlu0
    %v479 = vpop.trf.xlu0
    %v480 = vpop.trf.xlu0
    %v481 = vpop.trf.xlu0
    %v482 = vpop.trf.xlu0
    %v483 = vpop.trf.xlu0
    %v484 = vpop.trf.xlu0
    %v485 = vpop.trf.xlu0
    %v486 = vpop.trf.xlu0
    %v487 = vpop.trf.xlu0
    %v488 = vpop.trf.xlu0
    %vm489 = vcmask 64512
    %v491 = vsel %vm489, %v473, 0
    %v494 = vsel %vm489, %v474, 0
    %v497 = vsel %vm489, %v475, 0
    %v500 = vsel %vm489, %v476, 0
    %v503 = vsel %vm489, %v477, 0
    %v506 = vsel %vm489, %v478, 0
    %v509 = vsel %vm489, %v479, 0
    %v512 = vsel %vm489, %v480, 0
    %v515 = vsel %vm489, %v481, 0
    %v518 = vsel %vm489, %v482, 0
    %v521 = vsel %vm489, %v483, 0
    %v524 = vsel %vm489, %v484, 0
    %v527 = vsel %vm489, %v485, 0
    %v530 = vsel %vm489, %v486, 0
    %v533 = vsel %vm489, %v487, 0
    %v536 = vsel %vm489, %v488, 0
    %538 = vmatprep.subr.mxu0 0.0
    %539 = vmatpush1.msra.mxu0 0.0
    %540 = vmatprep.subr.mxu0 0.0
    %541 = vmatpush1.msra.mxu0 0.0
    %542 = vmatprep.subr.mxu0 0.0
    %543 = vmatpush1.msra.mxu0 0.0
    %544 = vmatprep.subr.mxu0 0.0
    %545 = vmatpush1.msra.mxu0 0.0
    %546 = vmatprep.subr.mxu0 0.0
    %547 = vmatpush1.msra.mxu0 0.0
    %548 = vmatprep.subr.mxu0 0.0
    %549 = vmatpush1.msra.mxu0 0.0
    %550 = vmatprep.subr.mxu0 0.0
    %551 = vmatpush1.msra.mxu0 0.0
    %552 = vmatprep.subr.mxu0 0.0
    %553 = vmatpush1.msra.mxu0 0.0
    %554 = vmatprep.subr.mxu0 0.0
    %555 = vmatpush1.msra.mxu0 0.0
    %556 = vmatprep.subr.mxu0 0.0
    %557 = vmatpush1.msra.mxu0 0.0
    %558 = vmatprep.subr.mxu0 0.0
    %559 = vmatpush1.msra.mxu0 0.0
    %560 = vmatprep.subr.mxu0 0.0
    %561 = vmatpush1.msra.mxu0 0.0
    %562 = vmatprep.subr.mxu0 0.0
    %563 = vmatpush1.msra.mxu0 0.0
    %564 = vmatprep.subr.mxu0 0.0
    %565 = vmatpush1.msra.mxu0 0.0
    %566 = vmatprep.subr.mxu0 0.0
    %567 = vmatpush1.msra.mxu0 0.0
    %568 = vmatprep.subr.mxu0 0.0
    %569 = vmatpush1.msra.mxu0 %v456
    %570 = vmatprep.subr.mxu0 0.0
    %571 = vmatpush2.msra.mxu0 0.0
    %572 = vmatprep.subr.mxu0 0.0
    %573 = vmatpush2.msra.mxu0 0.0
    %574 = vmatprep.subr.mxu0 0.0
    %575 = vmatpush2.msra.mxu0 0.0
    %576 = vmatprep.subr.mxu0 0.0
    %577 = vmatpush2.msra.mxu0 0.0
    %578 = vmatprep.subr.mxu0 0.0
    %579 = vmatpush2.msra.mxu0 0.0
    %580 = vmatprep.subr.mxu0 0.0
    %581 = vmatpush2.msra.mxu0 0.0
    %582 = vmatprep.subr.mxu0 0.0
    %583 = vmatpush2.msra.mxu0 0.0
    %584 = vmatprep.subr.mxu0 0.0
    %585 = vmatpush2.msra.mxu0 0.0
    %586 = vmatprep.subr.mxu0 0.0
    %587 = vmatpush2.msra.mxu0 0.0
    %588 = vmatprep.subr.mxu0 0.0
    %589 = vmatpush2.msra.mxu0 0.0
    %590 = vmatprep.subr.mxu0 0.0
    %591 = vmatpush2.msra.mxu0 0.0
    %592 = vmatprep.subr.mxu0 0.0
    %593 = vmatpush2.msra.mxu0 0.0
    %594 = vmatprep.subr.mxu0 0.0
    %595 = vmatpush2.msra.mxu0 0.0
    %596 = vmatprep.subr.mxu0 0.0
    %597 = vmatpush2.msra.mxu0 0.0
    %598 = vmatprep.subr.mxu0 0.0
    %599 = vmatpush2.msra.mxu0 0.0
    %600 = vmatprep.subr.mxu0 0.0
    %601 = vmatpush2.msra.mxu0 0.0
    %602 = vmatprep.mubr.f32.mxu0 0.0
    %603 = vmatmul.mubr.f32.gmra.mxu0 %v491
    %v604 = vpop.f32.mrf.mxu0
    %v605 = vadd.f32 0.0, %v604
    %v606 = vpop.f32.mrf.mxu0
    %607 = vmatprep.mubr.f32.mxu0 0.0
    %608 = vmatmul.mubr.f32.gmra.mxu0 %v494
    %v609 = vpop.f32.mrf.mxu0
    %v610 = vadd.f32 0.0, %v609
    %v611 = vpop.f32.mrf.mxu0
    %612 = vmatprep.mubr.f32.mxu0 0.0
    %613 = vmatmul.mubr.f32.gmra.mxu0 %v497
    %v614 = vpop.f32.mrf.mxu0
    %v615 = vadd.f32 0.0, %v614
    %v616 = vpop.f32.mrf.mxu0
    %617 = vmatprep.mubr.f32.mxu0 0.0
    %618 = vmatmul.mubr.f32.gmra.mxu0 %v500
    %v619 = vpop.f32.mrf.mxu0
    %v620 = vadd.f32 0.0, %v619
    %v621 = vpop.f32.mrf.mxu0
    %622 = vmatprep.mubr.f32.mxu0 0.0
    %623 = vmatmul.mubr.f32.gmra.mxu0 %v503
    %v624 = vpop.f32.mrf.mxu0
    %v625 = vadd.f32 0.0, %v624
    %v626 = vpop.f32.mrf.mxu0
    %627 = vmatprep.mubr.f32.mxu0 0.0
    %628 = vmatmul.mubr.f32.gmra.mxu0 %v506
    %v629 = vpop.f32.mrf.mxu0
    %v630 = vadd.f32 0.0, %v629
    %v631 = vpop.f32.mrf.mxu0
    %632 = vmatprep.mubr.f32.mxu0 0.0
    %633 = vmatmul.mubr.f32.gmra.mxu0 %v509
    %v634 = vpop.f32.mrf.mxu0
    %v635 = vadd.f32 0.0, %v634
    %v636 = vpop.f32.mrf.mxu0
    %637 = vmatprep.mubr.f32.mxu0 0.0
    %638 = vmatmul.mubr.f32.gmra.mxu0 %v512
    %v639 = vpop.f32.mrf.mxu0
    %v640 = vadd.f32 0.0, %v639
    %v641 = vpop.f32.mrf.mxu0
    %642 = vmatprep.mubr.f32.mxu0 0.0
    %643 = vmatmul.mubr.f32.gmra.mxu0 %v515
    %v644 = vpop.f32.mrf.mxu0
    %v645 = vadd.f32 0.0, %v644
    %v646 = vpop.f32.mrf.mxu0
    %647 = vmatprep.mubr.f32.mxu0 0.0
    %648 = vmatmul.mubr.f32.gmra.mxu0 %v518
    %v649 = vpop.f32.mrf.mxu0
    %v650 = vadd.f32 0.0, %v649
    %v651 = vpop.f32.mrf.mxu0
    %652 = vmatprep.mubr.f32.mxu0 0.0
    %653 = vmatmul.mubr.f32.gmra.mxu0 %v521
    %v654 = vpop.f32.mrf.mxu0
    %v655 = vadd.f32 0.0, %v654
    %v656 = vpop.f32.mrf.mxu0
    %657 = vmatprep.mubr.f32.mxu0 0.0
    %658 = vmatmul.mubr.f32.gmra.mxu0 %v524
    %v659 = vpop.f32.mrf.mxu0
    %v660 = vadd.f32 0.0, %v659
    %v661 = vpop.f32.mrf.mxu0
    %662 = vmatprep.mubr.f32.mxu0 0.0
    %663 = vmatmul.mubr.f32.gmra.mxu0 %v527
    %v664 = vpop.f32.mrf.mxu0
    %v665 = vadd.f32 0.0, %v664
    %v666 = vpop.f32.mrf.mxu0
    %667 = vmatprep.mubr.f32.mxu0 0.0
    %668 = vmatmul.mubr.f32.gmra.mxu0 %v530
    %v669 = vpop.f32.mrf.mxu0
    %v670 = vadd.f32 0.0, %v669
    %v671 = vpop.f32.mrf.mxu0
    %672 = vmatprep.mubr.f32.mxu0 0.0
    %673 = vmatmul.mubr.f32.gmra.mxu0 %v533
    %v674 = vpop.f32.mrf.mxu0
    %v675 = vadd.f32 0.0, %v674
    %v676 = vpop.f32.mrf.mxu0
    %677 = vmatprep.mubr.f32.mxu0 0.0
    %678 = vmatmul.mubr.f32.gmra.mxu0 %v536
    %v679 = vpop.f32.mrf.mxu0
    %v680 = vadd.f32 0.0, %v679
    %v681 = vpop.f32.mrf.mxu0
    %682 = vdwg.mxu0
    %v683 = vmax.f32 %v605, 1e-06
    %v684 = vmax.f32 %v610, 1e-06
    %v685 = vmax.f32 %v615, 1e-06
    %v686 = vmax.f32 %v620, 1e-06
    %v687 = vmax.f32 %v625, 1e-06
    %v688 = vmax.f32 %v630, 1e-06
    %v689 = vmax.f32 %v635, 1e-06
    %v690 = vmax.f32 %v640, 1e-06
    %v691 = vmax.f32 %v645, 1e-06
    %v692 = vmax.f32 %v650, 1e-06
    %v693 = vmax.f32 %v655, 1e-06
    %v694 = vmax.f32 %v660, 1e-06
    %v695 = vmax.f32 %v665, 1e-06
    %v696 = vmax.f32 %v670, 1e-06
    %v697 = vmax.f32 %v675, 1e-06
    %v698 = vmax.f32 %v680, 1e-06
    %700 = vset.pattern.permute.xlu0 3
    %701 = vperm.xlu0 %700, %v683
    %v702 = vpop.permute.xlu0 %701
    %705 = vset.pattern.permute.xlu0 3
    %706 = vperm.xlu0 %705, %v684
    %v707 = vpop.permute.xlu0 %706
    %710 = vset.pattern.permute.xlu0 3
    %711 = vperm.xlu0 %710, %v685
    %v712 = vpop.permute.xlu0 %711
    %715 = vset.pattern.permute.xlu0 3
    %716 = vperm.xlu0 %715, %v686
    %v717 = vpop.permute.xlu0 %716
    %720 = vset.pattern.permute.xlu0 3
    %721 = vperm.xlu0 %720, %v687
    %v722 = vpop.permute.xlu0 %721
    %725 = vset.pattern.permute.xlu0 3
    %726 = vperm.xlu0 %725, %v688
    %v727 = vpop.permute.xlu0 %726
    %730 = vset.pattern.permute.xlu0 3
    %731 = vperm.xlu0 %730, %v689
    %v732 = vpop.permute.xlu0 %731
    %735 = vset.pattern.permute.xlu0 3
    %736 = vperm.xlu0 %735, %v690
    %v737 = vpop.permute.xlu0 %736
    %740 = vset.pattern.permute.xlu0 3
    %741 = vperm.xlu0 %740, %v691
    %v742 = vpop.permute.xlu0 %741
    %745 = vset.pattern.permute.xlu0 3
    %746 = vperm.xlu0 %745, %v692
    %v747 = vpop.permute.xlu0 %746
    %750 = vset.pattern.permute.xlu0 3
    %751 = vperm.xlu0 %750, %v693
    %v752 = vpop.permute.xlu0 %751
    %755 = vset.pattern.permute.xlu0 3
    %756 = vperm.xlu0 %755, %v694
    %v757 = vpop.permute.xlu0 %756
    %760 = vset.pattern.permute.xlu0 3
    %761 = vperm.xlu0 %760, %v695
    %v762 = vpop.permute.xlu0 %761
    %765 = vset.pattern.permute.xlu0 3
    %766 = vperm.xlu0 %765, %v696
    %v767 = vpop.permute.xlu0 %766
    %770 = vset.pattern.permute.xlu0 3
    %771 = vperm.xlu0 %770, %v697
    %v772 = vpop.permute.xlu0 %771
    %775 = vset.pattern.permute.xlu0 3
    %776 = vperm.xlu0 %775, %v698
    %v777 = vpop.permute.xlu0 %776
    %v779 = vrcp.pop %v702
    %v780 = vmul.f32 %v683, %v779
    %v781 = vrcp.pop %v707
    %v782 = vmul.f32 %v684, %v781
    %v783 = vrcp.pop %v712
    %v784 = vmul.f32 %v685, %v783
    %v785 = vrcp.pop %v717
    %v786 = vmul.f32 %v686, %v785
    %v787 = vrcp.pop %v722
    %v788 = vmul.f32 %v687, %v787
    %v789 = vrcp.pop %v727
    %v790 = vmul.f32 %v688, %v789
    %v791 = vrcp.pop %v732
    %v792 = vmul.f32 %v689, %v791
    %v793 = vrcp.pop %v737
    %v794 = vmul.f32 %v690, %v793
    %v795 = vrcp.pop %v742
    %v796 = vmul.f32 %v691, %v795
    %v797 = vrcp.pop %v747
    %v798 = vmul.f32 %v692, %v797
    %v799 = vrcp.pop %v752
    %v800 = vmul.f32 %v693, %v799
    %v801 = vrcp.pop %v757
    %v802 = vmul.f32 %v694, %v801
    %v803 = vrcp.pop %v762
    %v804 = vmul.f32 %v695, %v803
    %v805 = vrcp.pop %v767
    %v806 = vmul.f32 %v696, %v805
    %v807 = vrcp.pop %v772
    %v808 = vmul.f32 %v697, %v807
    %v809 = vrcp.pop %v777
    %v810 = vmul.f32 %v698, %v809
    %v811 = vmax.f32 %v780, 0.0
    %v812 = vmax.f32 %v782, 0.0
    %v813 = vmax.f32 %v784, 0.0
    %v814 = vmax.f32 %v786, 0.0
    %v815 = vmax.f32 %v788, 0.0
    %v816 = vmax.f32 %v790, 0.0
    %v817 = vmax.f32 %v792, 0.0
    %v818 = vmax.f32 %v794, 0.0
    %v819 = vmax.f32 %v796, 0.0
    %v820 = vmax.f32 %v798, 0.0
    %v821 = vmax.f32 %v800, 0.0
    %v822 = vmax.f32 %v802, 0.0
    %v823 = vmax.f32 %v804, 0.0
    %v824 = vmax.f32 %v806, 0.0
    %v825 = vmax.f32 %v808, 0.0
    %v826 = vmax.f32 %v810, 0.0
    %v827 = vmin.f32 %v811, 1.0
    %v828 = vmin.f32 %v812, 1.0
    %v829 = vmin.f32 %v813, 1.0
    %v830 = vmin.f32 %v814, 1.0
    %v831 = vmin.f32 %v815, 1.0
    %v832 = vmin.f32 %v816, 1.0
    %v833 = vmin.f32 %v817, 1.0
    %v834 = vmin.f32 %v818, 1.0
    %v835 = vmin.f32 %v819, 1.0
    %v836 = vmin.f32 %v820, 1.0
    %v837 = vmin.f32 %v821, 1.0
    %v838 = vmin.f32 %v822, 1.0
    %v839 = vmin.f32 %v823, 1.0
    %v840 = vmin.f32 %v824, 1.0
    %v841 = vmin.f32 %v825, 1.0
    %v842 = vmin.f32 %v826, 1.0
    %843 = vmatprep.subr.mxu0 0.0
    %844 = vmatpush1.msra.mxu0 %v842
    %845 = vmatprep.subr.mxu0 0.0
    %846 = vmatpush1.msra.mxu0 %v841
    %847 = vmatprep.subr.mxu0 0.0
    %848 = vmatpush1.msra.mxu0 %v840
    %849 = vmatprep.subr.mxu0 0.0
    %850 = vmatpush1.msra.mxu0 %v839
    %851 = vmatprep.subr.mxu0 0.0
    %852 = vmatpush1.msra.mxu0 %v838
    %853 = vmatprep.subr.mxu0 0.0
    %854 = vmatpush1.msra.mxu0 %v837
    %855 = vmatprep.subr.mxu0 0.0
    %856 = vmatpush1.msra.mxu0 %v836
    %857 = vmatprep.subr.mxu0 0.0
    %858 = vmatpush1.msra.mxu0 %v835
    %859 = vmatprep.subr.mxu0 0.0
    %860 = vmatpush1.msra.mxu0 %v834
    %861 = vmatprep.subr.mxu0 0.0
    %862 = vmatpush1.msra.mxu0 %v833
    %863 = vmatprep.subr.mxu0 0.0
    %864 = vmatpush1.msra.mxu0 %v832
    %865 = vmatprep.subr.mxu0 0.0
    %866 = vmatpush1.msra.mxu0 %v831
    %867 = vmatprep.subr.mxu0 0.0
    %868 = vmatpush1.msra.mxu0 %v830
    %869 = vmatprep.subr.mxu0 0.0
    %870 = vmatpush1.msra.mxu0 %v829
    %871 = vmatprep.subr.mxu0 0.0
    %872 = vmatpush1.msra.mxu0 %v828
    %873 = vmatprep.subr.mxu0 0.0
    %874 = vmatpush1.msra.mxu0 %v827
    %875 = vmatprep.subr.mxu0 0.0
    %876 = vmatpush2.msra.mxu0 0.0
    %877 = vmatprep.subr.mxu0 0.0
    %878 = vmatpush2.msra.mxu0 0.0
    %879 = vmatprep.subr.mxu0 0.0
    %880 = vmatpush2.msra.mxu0 0.0
    %881 = vmatprep.subr.mxu0 0.0
    %882 = vmatpush2.msra.mxu0 0.0
    %883 = vmatprep.subr.mxu0 0.0
    %884 = vmatpush2.msra.mxu0 0.0
    %885 = vmatprep.subr.mxu0 0.0
    %886 = vmatpush2.msra.mxu0 0.0
    %887 = vmatprep.subr.mxu0 0.0
    %888 = vmatpush2.msra.mxu0 0.0
    %889 = vmatprep.subr.mxu0 0.0
    %890 = vmatpush2.msra.mxu0 0.0
    %891 = vmatprep.subr.mxu0 0.0
    %892 = vmatpush2.msra.mxu0 0.0
    %893 = vmatprep.subr.mxu0 0.0
    %894 = vmatpush2.msra.mxu0 0.0
    %895 = vmatprep.subr.mxu0 0.0
    %896 = vmatpush2.msra.mxu0 0.0
    %897 = vmatprep.subr.mxu0 0.0
    %898 = vmatpush2.msra.mxu0 0.0
    %899 = vmatprep.subr.mxu0 0.0
    %900 = vmatpush2.msra.mxu0 0.0
    %901 = vmatprep.subr.mxu0 0.0
    %902 = vmatpush2.msra.mxu0 0.0
    %903 = vmatprep.subr.mxu0 0.0
    %904 = vmatpush2.msra.mxu0 0.0
    %905 = vmatprep.subr.mxu0 0.0
    %906 = vmatpush2.msra.mxu0 0.0
    %907 = vmatprep.mubr.f32.mxu0 0.0
    %908 = vmatmul.mubr.f32.gmra.mxu0 %v433
    %v909 = vpop.f32.mrf.mxu0
    %v910 = vadd.f32 0.0, %v909
    %v911 = vpop.f32.mrf.mxu0
    %912 = vdwg.mxu0
    %913 = vst [vmem:[#allocation9] sm:$0xff] %v910
    %v914 = vmul.f32 %v910, %v443
    %915 = vadd.xlane.f32.xlu0 %v914
    %v916 = vpop.xlane.xlu0 %915
    %vm917 = vcmp.gt.f32.partialorder %v446, 0.0
    %v918 = vsel %vm917, %v916, 1.0
    %v919 = vlog2.pop %v918
    %v920 = vmul.f32 %v919, 0.6931472
    %v921 = vsub.f32 0.0, %v920
    %vm922 = vcmask 7168
    %v923 = vsel %vm922, %v921, 0.0
    %v924 = vrot.slane %v923, 4
    %v925 = vadd.f32 %v923, %v924
    %v926 = vrot.slane %v925, 2
    %v927 = vadd.f32 %v925, %v926
    %v928 = vrot.slane %v927, 1
    %v929 = vadd.f32 %v927, %v928
    %v930 = vmul.f32 %v929, 0.125
    %vm931 = vcmask 0
    %932 = vst.msk [vmem:[#allocation11] sm:$0x1] %vm931, %v930
    // Predicated region
    $region34: #{tpu_custom_call.1} parent=1 // pred_check
      _
    $region35: #{tpu_custom_call.1} parent=1 // pred_check_branch
      %934 = sbr.rel (0) target = $region37
    $region36: #{tpu_custom_call.1} parent=1 // pred_region
      %s936 = ssub.s32 128, 128
      %937 = vsyncadd [#allocation4], %s936
      %s939 = sshll.u32 [#allocation8], 4
      %s940 = int_to_ptr.vmem [resolvable:$true] %s939
      %942 = dma.vmem_to_hbm [thread:$0]  %s940, 128, %s5, [#allocation4]
    $region37: #{tpu_custom_call.1} parent=1 // pred_fallthru
      _
    // Predicated region
    $region38: #{tpu_custom_call.1} parent=1 // pred_check
      _
    $region39: #{tpu_custom_call.1} parent=1 // pred_check_branch
      %944 = sbr.rel (0) target = $region41
    $region40: #{tpu_custom_call.1} parent=1 // pred_region
      %s946 = ssub.s32 128, 128
      %947 = vsyncadd [#allocation10], %s946
      %s949 = sshll.u32 [#allocation9], 4
      %s950 = int_to_ptr.vmem [resolvable:$true] %s949
      %952 = dma.vmem_to_hbm [thread:$0]  %s950, 128, %s6, [#allocation10]
    $region41: #{tpu_custom_call.1} parent=1 // pred_fallthru
      _
    // Predicated region
    $region42: #{tpu_custom_call.1} parent=1 // pred_check
      _
    $region43: #{tpu_custom_call.1} parent=1 // pred_check_branch
      %954 = sbr.rel (0) target = $region45
    $region44: #{tpu_custom_call.1} parent=1 // pred_region
      %s956 = ssub.s32 16, 16
      %957 = vsyncadd [#allocation10], %s956
      %s959 = sshll.u32 [#allocation11], 4
      %s960 = int_to_ptr.vmem [resolvable:$true] %s959
      %962 = dma.vmem_to_hbm [thread:$0]  %s960, 16, %s7, [#allocation10]
    $region45: #{tpu_custom_call.1} parent=1 // pred_fallthru
      _
    // Predicated region
    $region46: #{tpu_custom_call.1} parent=1 // pred_check
      _
    $region47: #{tpu_custom_call.1} parent=1 // pred_check_branch
      %964 = sbr.rel (0) target = $region49
    $region48: #{tpu_custom_call.1} parent=1 // pred_region
      %965 = dma.done [#allocation4], 128
    $region49: #{tpu_custom_call.1} parent=1 // pred_fallthru
      _
    // Predicated region
    $region50: #{tpu_custom_call.1} parent=1 // pred_check
      _
    $region51: #{tpu_custom_call.1} parent=1 // pred_check_branch
      %967 = sbr.rel (0) target = $region53
    $region52: #{tpu_custom_call.1} parent=1 // pred_region
      %968 = dma.done [#allocation10], 128
    $region53: #{tpu_custom_call.1} parent=1 // pred_fallthru
      _
    // Predicated region
    $region54: #{tpu_custom_call.1} parent=1 // pred_check
      _
    $region55: #{tpu_custom_call.1} parent=1 // pred_check_branch
      %970 = sbr.rel (0) target = $region57
    $region56: #{tpu_custom_call.1} parent=1 // pred_region
      %971 = dma.done [#allocation10], 16
    $region57: #{tpu_custom_call.1} parent=1 // pred_fallthru
      _
    %972 = vsyncpa [#allocation3], 1
    %973 = vsyncpa [#allocation6], 1
    %974 = vsyncpa [#allocation4], 1
    %975 = vsyncpa [#allocation10], 1

</llo_original>
